<compile_context>
chip_gen: v7x
topology: tpu7x:2x2x1
jax: 0.10.0
libtpu: 0.0.40
codegen_flags: <defaults>
</compile_context>

<pallas_src>
import functools

import jax
import jax.numpy as jnp
from jax.experimental import pallas as pl
from jax.experimental.pallas import tpu as pltpu


def _class_embed_kernel(ids_ref, table_ref, out_ref, *, tb):
    # ids_ref:   (B_pad,) int32 class ids in SMEM (scalar-prefetched)
    # table_ref: (n_classes, D) embedding table, resident in VMEM
    # out_ref:   (tb, D) sublane/lane-dense output block for this batch tile
    base = pl.program_id(0) * tb
    # Gather tb rows from the resident table (dynamic sublane slices), then
    # issue a single dense (tb, D) store.
    rows = [table_ref[pl.ds(ids_ref[base + k], 1), :] for k in range(tb)]
    out_ref[...] = jnp.concatenate(rows, axis=0)


def class_embedder(class_ids, embedding_table, *, tile_b=8):
    """class_ids: int array [B]; embedding_table: [n_classes, D] -> [B, 1, D]."""
    B = class_ids.shape[0]
    n_classes, D = embedding_table.shape

    # Safety: clamp ids so an out-of-range id cannot read past the table.
    ids = jnp.clip(class_ids.astype(jnp.int32), 0, n_classes - 1)

    # Pad the batch to a multiple of the tile so the output block is
    # sublane-dense (tile_b is a multiple of 8); padding rows are discarded.
    b_pad = ((B + tile_b - 1) // tile_b) * tile_b
    if b_pad != B:
        ids = jnp.pad(ids, (0, b_pad - B))

    grid = (b_pad // tile_b,)

    # Explicit VMEM budget: double-buffered table + double-buffered output
    # block + margin.  Tiny for this module; still well under v7x's 64 MiB.
    itemsize = jnp.dtype(embedding_table.dtype).itemsize
    table_bytes = n_classes * D * itemsize
    out_block_bytes = tile_b * D * itemsize
    vmem_limit = max(2 * table_bytes + 2 * out_block_bytes + (1 << 20),
                     16 * 1024 * 1024)
    # TODO(synk): if the table ever exceeds ~24 MiB (v7x scoped VMEM budget),
    # fall back to a batched data-dependent DMA-gather path instead of the
    # resident-table path.

    grid_spec = pltpu.PrefetchScalarGridSpec(
        num_scalar_prefetch=1,          # class ids land in SMEM before the grid
        grid=grid,
        in_specs=[
            # Full table, same block index every step -> fetched once, kept
            # resident in VMEM for the whole grid.
            pl.BlockSpec((n_classes, D), lambda t, ids_ref: (0, 0)),
        ],
        # Lane/sublane-dense (tile_b, D) output block per batch tile.
        out_specs=pl.BlockSpec((tile_b, D), lambda t, ids_ref: (t, 0)),
    )

    out = pl.pallas_call(
        functools.partial(_class_embed_kernel, tb=tile_b),
        out_shape=jax.ShapeDtypeStruct((b_pad, D), embedding_table.dtype),
        grid_spec=grid_spec,
        compiler_params=pltpu.CompilerParams(
            dimension_semantics=("parallel",),   # batch tiles are independent
            vmem_limit_bytes=int(vmem_limit),
        ),
    )(ids, embedding_table)

    # Drop padding rows and add back the singleton "token" axis -> (B, 1, D).
    return out[:B, None, :]


if __name__ == "__main__":
    # Module hyperparameters (small but faithful shapes).
    N_CLASSES = 1000
    EMBED_DIM = 128
    BATCH = 2

    key = jax.random.PRNGKey(0)
    k_ids, k_emb = jax.random.split(key)

    # Deterministic synthetic parameters: nn.Embedding default init is N(0, 1).
    embedding_table = jax.random.normal(k_emb, (N_CLASSES, EMBED_DIM),
                                        dtype=jnp.float32)

    # batch = {"class": class_ids}
    class_ids = jax.random.randint(k_ids, (BATCH,), 0, N_CLASSES,
                                   dtype=jnp.int32)
    batch = {"class": class_ids}

    out = class_embedder(batch["class"], embedding_table)
    out = jax.block_until_ready(out)

    # Reference check (pure JAX gather).
    ref = embedding_table[class_ids][:, None, :]
    assert out.shape == (BATCH, 1, EMBED_DIM), out.shape
    assert jnp.allclose(out, ref), "mismatch vs reference embedding lookup"

    print("KERNEL_OK")
</pallas_src>

<mosaic_0001>
module attributes {stable_mosaic.version = 11 : i64} {
  func.func @_class_embed_kernel(%arg0: i32, %arg1: memref<8xi32, #tpu.memory_space<smem>>, %arg2: memref<1000x128xf32, #tpu.memory_space<vmem>>, %arg3: memref<8x128xf32, #tpu.memory_space<vmem>>) attributes {dimension_semantics = [#tpu.dimension_semantics<parallel>], iteration_bounds = array<i64: 1>, scalar_prefetch = 1 : i64, scratch_operands = 0 : i64, tpu.core_type = #tpu.core_type<tc>, window_params = [{pipeline_mode = #tpu.pipeline_mode<synchronous>, transform_indices = @transform_0, window_bounds = array<i64: 1000, 128>}, {transform_indices = @transform_1, window_bounds = array<i64: 8, 128>}]} {
    %c8_i32 = arith.constant 8 : i32
    %0 = arith.muli %arg0, %c8_i32 : i32
    %c0_i32 = arith.constant 0 : i32
    %1 = arith.addi %0, %c0_i32 : i32
    %2 = arith.index_cast %1 : i32 to index
    %3 = memref.load %arg1[%2] : memref<8xi32, #tpu.memory_space<smem>>
    %4 = arith.index_cast %3 : i32 to index
    %c0 = arith.constant 0 : index
    %5 = vector.load %arg2[%4, %c0] : memref<1000x128xf32, #tpu.memory_space<vmem>>, vector<1x128xf32>
    %c1_i32 = arith.constant 1 : i32
    %6 = arith.addi %0, %c1_i32 : i32
    %7 = arith.index_cast %6 : i32 to index
    %8 = memref.load %arg1[%7] : memref<8xi32, #tpu.memory_space<smem>>
    %9 = arith.index_cast %8 : i32 to index
    %c0_0 = arith.constant 0 : index
    %10 = vector.load %arg2[%9, %c0_0] : memref<1000x128xf32, #tpu.memory_space<vmem>>, vector<1x128xf32>
    %c2_i32 = arith.constant 2 : i32
    %11 = arith.addi %0, %c2_i32 : i32
    %12 = arith.index_cast %11 : i32 to index
    %13 = memref.load %arg1[%12] : memref<8xi32, #tpu.memory_space<smem>>
    %14 = arith.index_cast %13 : i32 to index
    %c0_1 = arith.constant 0 : index
    %15 = vector.load %arg2[%14, %c0_1] : memref<1000x128xf32, #tpu.memory_space<vmem>>, vector<1x128xf32>
    %c3_i32 = arith.constant 3 : i32
    %16 = arith.addi %0, %c3_i32 : i32
    %17 = arith.index_cast %16 : i32 to index
    %18 = memref.load %arg1[%17] : memref<8xi32, #tpu.memory_space<smem>>
    %19 = arith.index_cast %18 : i32 to index
    %c0_2 = arith.constant 0 : index
    %20 = vector.load %arg2[%19, %c0_2] : memref<1000x128xf32, #tpu.memory_space<vmem>>, vector<1x128xf32>
    %c4_i32 = arith.constant 4 : i32
    %21 = arith.addi %0, %c4_i32 : i32
    %22 = arith.index_cast %21 : i32 to index
    %23 = memref.load %arg1[%22] : memref<8xi32, #tpu.memory_space<smem>>
    %24 = arith.index_cast %23 : i32 to index
    %c0_3 = arith.constant 0 : index
    %25 = vector.load %arg2[%24, %c0_3] : memref<1000x128xf32, #tpu.memory_space<vmem>>, vector<1x128xf32>
    %c5_i32 = arith.constant 5 : i32
    %26 = arith.addi %0, %c5_i32 : i32
    %27 = arith.index_cast %26 : i32 to index
    %28 = memref.load %arg1[%27] : memref<8xi32, #tpu.memory_space<smem>>
    %29 = arith.index_cast %28 : i32 to index
    %c0_4 = arith.constant 0 : index
    %30 = vector.load %arg2[%29, %c0_4] : memref<1000x128xf32, #tpu.memory_space<vmem>>, vector<1x128xf32>
    %c6_i32 = arith.constant 6 : i32
    %31 = arith.addi %0, %c6_i32 : i32
    %32 = arith.index_cast %31 : i32 to index
    %33 = memref.load %arg1[%32] : memref<8xi32, #tpu.memory_space<smem>>
    %34 = arith.index_cast %33 : i32 to index
    %c0_5 = arith.constant 0 : index
    %35 = vector.load %arg2[%34, %c0_5] : memref<1000x128xf32, #tpu.memory_space<vmem>>, vector<1x128xf32>
    %c7_i32 = arith.constant 7 : i32
    %36 = arith.addi %0, %c7_i32 : i32
    %37 = arith.index_cast %36 : i32 to index
    %38 = memref.load %arg1[%37] : memref<8xi32, #tpu.memory_space<smem>>
    %39 = arith.index_cast %38 : i32 to index
    %c0_6 = arith.constant 0 : index
    %40 = vector.load %arg2[%39, %c0_6] : memref<1000x128xf32, #tpu.memory_space<vmem>>, vector<1x128xf32>
    %41 = tpu.concatenate %5, %10, %15, %20, %25, %30, %35, %40 in 0 : vector<1x128xf32>, vector<1x128xf32>, vector<1x128xf32>, vector<1x128xf32>, vector<1x128xf32>, vector<1x128xf32>, vector<1x128xf32>, vector<1x128xf32> -> vector<8x128xf32>
    %c0_7 = arith.constant 0 : index
    %c0_8 = arith.constant 0 : index
    %42 = vector.load %arg3[%c0_7, %c0_8] : memref<8x128xf32, #tpu.memory_space<vmem>>, vector<8x128xf32>
    tpu.vector_store %arg3[%c0_7, %c0_8], %41 {strides = array<i32>} : memref<8x128xf32, #tpu.memory_space<vmem>>, vector<8x128xf32>,
    return
  }
  func.func @transform_0(%arg0: i32, %arg1: memref<8xi32, #tpu.memory_space<smem>>) -> (i32, i32) {
    %c0_i32 = arith.constant 0 : i32
    %c0_i32_0 = arith.constant 0 : i32
    %c0_i32_1 = arith.constant 0 : i32
    return %c0_i32, %c0_i32_0 : i32, i32
  }
  func.func @transform_1(%arg0: i32, %arg1: memref<8xi32, #tpu.memory_space<smem>>) -> (i32, i32) {
    %c0_i32 = arith.constant 0 : i32
    %c0_i32_0 = arith.constant 0 : i32
    return %arg0, %c0_i32 : i32, i32
  }
}

</mosaic_0001>

<llo_original>
// kernel: tpu_custom_call.1
$region0: #{tpu_custom_call.1}
  #allocation0 [shape = 'u32[]', space=smem, size = 0x4, offset = 0x4, fixed_abs, tag = 'smem constant byte address 0x4 - core index']
  #allocation1 [shape = 'u32[144,128]{1,0:T(1,128)}', space=vmem, size = 0x12000, scoped, tag = 'internal scratch']
  #allocation2 [shape = 's32[1]{0}', space=sflag, size = 0x4, scoped, tag = 'scoped memory for tpu_custom_call.1']
  #allocation3 [shape = 'u8[512]{0}', space=smem, size = 0x200, scoped, tag = 'prefetched SMEM operand 0']
  %s0 = inlined_call_operand.hbm [shape: s32[8], index: 0, kind: input, shape index: {}]
  %s1 = inlined_call_operand.hbm [shape: f32[1000,128], index: 1, kind: input, shape index: {}]
  %s2 = inlined_call_operand.hbm [shape: f32[8,128], index: 2, kind: output, shape index: {}]
  %s3 = sld [smem:[#allocation0]]
  $region18: #{tpu_custom_call.1} parent=0
    _
  %s5 = ssub.s32 1, %s3
  %s6 = scalar_select 0, %s5, %s3
  %8 = dma.hbm_to_smem %s0, 16, [#allocation3], [#allocation2]
  %9 = dma.done [#allocation2], 16
  %10 = sfence
  $region1: #{tpu_custom_call.1} parent=0
    #allocation4 [shape = 'u8[512000]{0}', space=vmem, size = 0x7d000, scoped, tag = 'input window, operand 1, single buffered']
    #allocation5 [shape = 's32[1]{0}', space=sflag, size = 0x4, scoped, tag = 'scoped memory for tpu_custom_call.1']
    #allocation6 [shape = 's32[1]{0}', space=sflag, size = 0x4, scoped, tag = 'scoped memory for tpu_custom_call.1']
    #allocation7 [shape = 'u8[4096]{0}', space=vmem, size = 0x1000, scoped, tag = 'output window, operand 0, single buffered']
    %11 = vsyncpa [#allocation5], 0
    %12 = vsyncpa [#allocation6], 0
    // Predicated region
    $region2: #{tpu_custom_call.1} parent=1 // pred_check
      _
    $region3: #{tpu_custom_call.1} parent=1 // pred_check_branch
      %14 = sbr.rel (0) target = $region5
    $region4: #{tpu_custom_call.1} parent=1 // pred_region
      %s16 = ssub.s32 16000, 16000
      %17 = vsyncadd [#allocation5], %s16
      %s18 = sshll.u32 [#allocation4], 4
      %s19 = int_to_ptr.vmem [resolvable:$true] %s18
      %24 = dma.hbm_to_vmem [thread:$0]  %s1, 16000, %s19, [#allocation5], 128, 128, 8
    $region5: #{tpu_custom_call.1} parent=1 // pred_fallthru
      _
    // Predicated region
    $region6: #{tpu_custom_call.1} parent=1 // pred_check
      _
    $region7: #{tpu_custom_call.1} parent=1 // pred_check_branch
      %26 = sbr.rel (0) target = $region9
    $region8: #{tpu_custom_call.1} parent=1 // pred_region
      %27 = dma.done [#allocation5], 16000
    $region9: #{tpu_custom_call.1} parent=1 // pred_fallthru
      _
    %s28 = smul.u32 0, 8
    %s29 = sld [smem:[#allocation3 + %s28]]
    %s30 = scalar_lea.vmem [#allocation4], %s29
    %v31 = vld [vmem:[%s30] sm:$0x1]
    %s32 = sadd.s32 %s28, 1
    %s33 = sld [smem:[#allocation3 + %s32]]
    %s34 = scalar_lea.vmem [#allocation4], %s33
    %v35 = vld [vmem:[%s34] sm:$0x1]
    %s36 = sadd.s32 %s28, 2
    %s37 = sld [smem:[#allocation3 + %s36]]
    %s38 = scalar_lea.vmem [#allocation4], %s37
    %v39 = vld [vmem:[%s38] sm:$0x1]
    %s40 = sadd.s32 %s28, 3
    %s41 = sld [smem:[#allocation3 + %s40]]
    %s42 = scalar_lea.vmem [#allocation4], %s41
    %v43 = vld [vmem:[%s42] sm:$0x1]
    %s44 = sadd.s32 %s28, 4
    %s45 = sld [smem:[#allocation3 + %s44]]
    %s46 = scalar_lea.vmem [#allocation4], %s45
    %v47 = vld [vmem:[%s46] sm:$0x1]
    %s48 = sadd.s32 %s28, 5
    %s49 = sld [smem:[#allocation3 + %s48]]
    %s50 = scalar_lea.vmem [#allocation4], %s49
    %v51 = vld [vmem:[%s50] sm:$0x1]
    %s52 = sadd.s32 %s28, 6
    %s53 = sld [smem:[#allocation3 + %s52]]
    %s54 = scalar_lea.vmem [#allocation4], %s53
    %v55 = vld [vmem:[%s54] sm:$0x1]
    %s56 = sadd.s32 %s28, 7
    %s57 = sld [smem:[#allocation3 + %s56]]
    %s58 = scalar_lea.vmem [#allocation4], %s57
    %v59 = vld [vmem:[%s58] sm:$0x1]
    %v61 = vrot.slane %v35, 7
    %v64 = vrot.slane %v39, 6
    %v67 = vrot.slane %v43, 5
    %v70 = vrot.slane %v47, 4
    %v73 = vrot.slane %v51, 3
    %v76 = vrot.slane %v55, 2
    %v79 = vrot.slane %v59, 1
    %vm81 = vcmask 1040384
    %v82 = vsel %vm81, %v31, %v61
    %vm83 = vcmask 1041408
    %v84 = vsel %vm83, %v82, %v64
    %vm85 = vcmask 1042432
    %v86 = vsel %vm85, %v84, %v67
    %vm87 = vcmask 1043456
    %v88 = vsel %vm87, %v86, %v70
    %vm89 = vcmask 1044480
    %v90 = vsel %vm89, %v88, %v73
    %vm91 = vcmask 1045504
    %v92 = vsel %vm91, %v90, %v76
    %vm93 = vcmask 1046528
    %v94 = vsel %vm93, %v92, %v79
    %95 = vst [vmem:[#allocation7] sm:$0xff] %v94
    // Predicated region
    $region10: #{tpu_custom_call.1} parent=1 // pred_check
      _
    $region11: #{tpu_custom_call.1} parent=1 // pred_check_branch
      %97 = sbr.rel (0) target = $region13
    $region12: #{tpu_custom_call.1} parent=1 // pred_region
      %s99 = ssub.s32 128, 128
      %100 = vsyncadd [#allocation6], %s99
      %s102 = sshll.u32 [#allocation7], 4
      %s103 = int_to_ptr.vmem [resolvable:$true] %s102
      %105 = dma.vmem_to_hbm [thread:$0]  %s103, 128, %s2, [#allocation6]
    $region13: #{tpu_custom_call.1} parent=1 // pred_fallthru
      _
    // Predicated region
    $region14: #{tpu_custom_call.1} parent=1 // pred_check
      _
    $region15: #{tpu_custom_call.1} parent=1 // pred_check_branch
      %107 = sbr.rel (0) target = $region17
    $region16: #{tpu_custom_call.1} parent=1 // pred_region
      %108 = dma.done [#allocation6], 128
    $region17: #{tpu_custom_call.1} parent=1 // pred_fallthru
      _
    %109 = vsyncpa [#allocation5], 1
    %110 = vsyncpa [#allocation6], 1

</llo_original>
